<compile_context>
chip_gen: v7x
topology: tpu7x:2x2x1
jax: 0.10.0
libtpu: 0.0.40
codegen_flags: <defaults>
</compile_context>

<pallas_src>
import math

import jax
import jax.numpy as jnp
from jax import lax
from jax.experimental import pallas as pl
from jax.experimental.pallas import tpu as pltpu

VMEM = pl.BlockSpec(memory_space=pltpu.MemorySpace.VMEM)
SMEM = pl.BlockSpec(memory_space=pltpu.MemorySpace.SMEM)
ANYMS = pl.BlockSpec(memory_space=pl.ANY)

LANE = 128
_GATHER_DEPTH = 8                      # outstanding embedding-row DMAs (power of 2)
_SMALL_TABLE_BYTES = 2 * 1024 * 1024   # below this the table just lives in VMEM


def _round_up(x, m):
    return (x + m - 1) // m * m


# ----------------------- embedding lookup -----------------------
def _embed_onehot_kernel(tok_ref, table_ref, out_ref):
    # Fast path (small vocab): table resident in VMEM, gather = one-hot MXU dot.
    # tok_ref: (N,1) i32 VMEM ; table_ref: (VP, HP) bf16 VMEM ; out: (N, HP) bf16.
    N = out_ref.shape[0]
    VP = table_ref.shape[0]
    cols = lax.broadcasted_iota(jnp.int32, (N, VP), 1)
    onehot = (cols == tok_ref[...]).astype(jnp.bfloat16)
    out_ref[...] = jnp.dot(onehot, table_ref[...],
                           preferred_element_type=jnp.float32).astype(out_ref.dtype)


def _embed_gather_kernel(tok_ref, table_ref, out_ref, sem):
    # Large-vocab path: table stays in HBM; depth-_GATHER_DEPTH row-DMA pipeline.
    # tok_ref: SMEM (N,) i32 ; table_ref: HBM (VP, HP) ; out_ref: VMEM (N, HP).
    N = out_ref.shape[0]
    V = table_ref.shape[0]

    def issue(idx, tok, slot):
        tok = jnp.clip(tok, 0, V - 1)          # torch would raise on OOB; we clamp
        pltpu.make_async_copy(table_ref.at[pl.ds(tok, 1)],
                              out_ref.at[pl.ds(idx, 1)],
                              sem.at[slot]).start()

    for i in range(min(_GATHER_DEPTH, N)):     # prime the pipeline
        issue(i, tok_ref[i], i & (_GATHER_DEPTH - 1))

    def body(i, carry):
        slot = i & (_GATHER_DEPTH - 1)
        nxt = i + _GATHER_DEPTH
        # Read the next id from SMEM BEFORE the wait (wait breaks sst->sld fwd).
        tok_next = tok_ref[jnp.minimum(nxt, N - 1)]
        # Wait for row i (same-size descriptor on the same semaphore slot).
        pltpu.make_async_copy(table_ref.at[pl.ds(0, 1)],
                              out_ref.at[pl.ds(i, 1)],
                              sem.at[slot]).wait()

        @pl.when(nxt < N)
        def _():
            issue(nxt, tok_next, slot)

        return carry

    lax.fori_loop(0, N, body, 0)


def embedding_lookup(token_ids_flat, table):
    N = token_ids_flat.shape[0]
    _, HP = table.shape
    if table.size * table.dtype.itemsize <= _SMALL_TABLE_BYTES:
        ids = token_ids_flat.reshape(N, 1).astype(jnp.int32)
        return pl.pallas_call(
            _embed_onehot_kernel,
            out_shape=jax.ShapeDtypeStruct((N, HP), jnp.bfloat16),
            in_specs=[VMEM, VMEM],
            out_specs=VMEM,
            compiler_params=pltpu.CompilerParams(vmem_limit_bytes=32 * 1024 * 1024),
        )(ids, table)
    # TODO(synk): for very large V, gather multiple rows per DMA descriptor.
    return pl.pallas_call(
        _embed_gather_kernel,
        out_shape=jax.ShapeDtypeStruct((N, HP), table.dtype),
        in_specs=[SMEM, ANYMS],
        out_specs=VMEM,
        scratch_shapes=[pltpu.SemaphoreType.DMA((_GATHER_DEPTH,))],
        compiler_params=pltpu.CompilerParams(vmem_limit_bytes=32 * 1024 * 1024),
    )(token_ids_flat.astype(jnp.int32), table)


# ----------------------- fused bidirectional GRU layer kernel -----------------------
# Gate order (r, z, n) like torch.nn.GRU; gate g lives at lanes [g*HP, (g+1)*HP).
# x is flattened time-major: row t*B + b holds timestep t, batch b.
def _make_bigru_kernel(T, B, HP, fused_fc):
    G3 = 3 * HP
    STATIC_T = T <= 32          # demo-scale: fully static time loop (constant offsets)

    def recurrence(x_ref, len_ref, wih_ref, bih_ref,
                   whh_f_ref, bhh_f_ref, whh_b_ref, bhh_b_ref,
                   gi_scr, seq_out_ref):
        # (1) Input projection for BOTH directions in one MXU dot, hoisted out
        #     of the recurrence: (T*B, Din) x (Din, 6*HP) bf16 -> f32.
        gi_scr[...] = (jnp.dot(x_ref[...].astype(jnp.bfloat16), wih_ref[...],
                               preferred_element_type=jnp.float32)
                       + bih_ref[...])

        # (2) Loop invariants hoisted (JAX does not CSE broadcasts inside loops).
        lens = len_ref[...]                                  # (B, 1) i32
        whh_f = whh_f_ref[...]                               # (HP, 3*HP) bf16
        whh_b = whh_b_ref[...]
        bhh_f = jnp.broadcast_to(bhh_f_ref[...], (B, G3))    # (B, 3*HP) f32
        bhh_b = jnp.broadcast_to(bhh_b_ref[...], (B, G3))

        def cell(gi, h, whh, bhh):
            # All slices on 128-lane (HP) boundaries -> full-vreg ops; elementwise
            # math in f32 (v5e-safe), matmul operands bf16 with f32 accumulate.
            gh = jnp.dot(h.astype(jnp.bfloat16), whh,
                         preferred_element_type=jnp.float32) + bhh
            r = jax.nn.sigmoid(gi[:, 0:HP] + gh[:, 0:HP])
            z = jax.nn.sigmoid(gi[:, HP:2 * HP] + gh[:, HP:2 * HP])
            n = jnp.tanh(gi[:, 2 * HP:] + r * gh[:, 2 * HP:])
            return (1.0 - z) * n + z * h

        def step(s, carry):
            hf, hb = carry                   # h carried in vregs, not VMEM
            tf = s                           # forward timestep
            tb = T - 1 - s                   # backward timestep (independent -> ILP)
            if isinstance(s, int):
                rf, rb = tf * B, tb * B      # static offsets on the demo path
            else:
                rf = pl.multiple_of(tf * B, B)
                rb = pl.multiple_of(tb * B, B)

            hf_new = cell(gi_scr[pl.ds(rf, B), 0:G3], hf, whh_f, bhh_f)
            hb_new = cell(gi_scr[pl.ds(rb, B), G3:2 * G3], hb, whh_b, bhh_b)

            # pack_padded_sequence semantics: freeze h once t >= length.
            hf_upd = jnp.where(tf < lens, hf_new, hf)
            hb_upd = jnp.where(tb < lens, hb_new, hb)

            if seq_out_ref is not None:
                # Lane-dense bf16 stores at 128-lane column boundaries.
                seq_out_ref[pl.ds(rf, B), 0:HP] = hf_upd.astype(seq_out_ref.dtype)
                seq_out_ref[pl.ds(rb, B), HP:2 * HP] = hb_upd.astype(seq_out_ref.dtype)
            return hf_upd, hb_upd

        h0 = jnp.zeros((B, HP), jnp.float32)
        if STATIC_T:
            carry = (h0, h0)
            for s in range(T):
                carry = step(s, carry)
            hf, hb = carry
        else:
            # TODO(synk): stream gi/x/seq_out over T-chunks at production T
            #             instead of whole-T VMEM residency.
            hf, hb = lax.fori_loop(0, T, step, (h0, h0), unroll=4)
        return hf, hb

    if not fused_fc:
        def kernel(x_ref, len_ref, wih_ref, bih_ref,
                   whh_f_ref, bhh_f_ref, whh_b_ref, bhh_b_ref,
                   seq_out_ref, gi_scr):
            recurrence(x_ref, len_ref, wih_ref, bih_ref,
                       whh_f_ref, bhh_f_ref, whh_b_ref, bhh_b_ref,
                       gi_scr, seq_out_ref)
    else:
        def kernel(x_ref, len_ref, wih_ref, bih_ref,
                   whh_f_ref, bhh_f_ref, whh_b_ref, bhh_b_ref,
                   fc_w_ref, fc_b_ref, logits_ref, gi_scr):
            # Last layer: no sequence output; FC fused into the finalize phase.
            hf, hb = recurrence(x_ref, len_ref, wih_ref, bih_ref,
                                whh_f_ref, bhh_f_ref, whh_b_ref, bhh_b_ref,
                                gi_scr, None)
            # torch: hidden_cat = cat([hidden[-1], hidden[-2]], dim=1) = [bwd, fwd];
            # single MXU dot with K = 2*HP.
            hcat = jnp.concatenate([hb.astype(jnp.bfloat16),
                                    hf.astype(jnp.bfloat16)], axis=1)
            logits_ref[...] = (jnp.dot(hcat, fc_w_ref[...],
                                       preferred_element_type=jnp.float32)
                               + fc_b_ref[...])

    return kernel


def bigru_layer(x_flat, lens, lp, *, T, B, HP, fc=None):
    N = T * B
    fused_fc = fc is not None
    kernel = _make_bigru_kernel(T, B, HP, fused_fc)
    args = [x_flat, lens, lp["w_ih"], lp["b_ih"],
            lp["w_hh_f"], lp["b_hh_f"], lp["w_hh_b"], lp["b_hh_b"]]
    if fused_fc:
        fc_w, fc_b = fc
        args += [fc_w, fc_b]
        out_shape = jax.ShapeDtypeStruct((B, fc_w.shape[1]), jnp.float32)
    else:
        out_shape = jax.ShapeDtypeStruct((N, 2 * HP), jnp.bfloat16)   # bf16 inter-layer
    return pl.pallas_call(
        kernel,
        out_shape=out_shape,
        in_specs=[VMEM] * len(args),
        out_specs=VMEM,
        scratch_shapes=[pltpu.VMEM((N, 6 * HP), jnp.float32)],        # fused gi (fwd|bwd)
        compiler_params=pltpu.CompilerParams(vmem_limit_bytes=32 * 1024 * 1024),
    )(*args)


# ----------------------- full forward (glue in plain JAX) -----------------------
def rnn_classifier_forward(params, tokens_bt, seq_length):
    tokens_tb = tokens_bt.T                                    # torch: input.t() -> (T, B)
    T, B = tokens_tb.shape
    HP = params["hidden_padded"]

    # Flattened time-major layout (row = t*B + b) used by all GRU kernels.
    x = embedding_lookup(tokens_tb.reshape(T * B).astype(jnp.int32),
                         params["emb"])                        # (T*B, HP) bf16
    lens = seq_length.reshape(B, 1).astype(jnp.int32)          # (B, 1)

    n_layers = len(params["gru"])
    for l, lp in enumerate(params["gru"]):
        last = l == n_layers - 1
        x = bigru_layer(x, lens, lp, T=T, B=B, HP=HP,
                        fc=(params["fc_w"], params["fc_b"]) if last else None)
    return x[:, :params["out_features"]]                       # strip lane padding -> (B, O)


# ----------------------- deterministic, lane-padded parameter init -----------------------
def _pad_gate_cols(w, h, hp):
    # (..., 3*h) -> (..., 3*hp); gate g moved to lanes [g*hp, g*hp+h). Rest zero.
    out = jnp.zeros(w.shape[:-1] + (3 * hp,), w.dtype)
    for g in range(3):
        out = out.at[..., g * hp:g * hp + h].set(w[..., g * h:(g + 1) * h])
    return out


def _pad_row_blocks(w, h, hp, nblk):
    # (nblk*h, C) -> (nblk*hp, C); block d moved to rows [d*hp, d*hp+h). Rest zero.
    out = jnp.zeros((nblk * hp,) + w.shape[1:], w.dtype)
    for d in range(nblk):
        out = out.at[d * hp:d * hp + h].set(w[d * h:(d + 1) * h])
    return out


def init_params(key, vocab, hidden, output, num_layers):
    HP = _round_up(hidden, LANE)
    OP = _round_up(output, LANE)
    VP = _round_up(vocab, LANE)
    k = 1.0 / math.sqrt(hidden)
    keys = jax.random.split(key, 2 + num_layers)

    emb = jax.random.normal(keys[0], (vocab, hidden), jnp.float32)
    emb_p = jnp.zeros((VP, HP), jnp.float32).at[:vocab, :hidden].set(emb)
    params = {"emb": emb_p.astype(jnp.bfloat16),
              "hidden_padded": HP, "out_features": output}

    gru = []
    for l in range(num_layers):
        din = hidden if l == 0 else 2 * hidden
        nblk = 1 if l == 0 else 2                 # input direction blocks
        kk = jax.random.split(keys[1 + l], 8)

        def u(key_, shape):
            return jax.random.uniform(key_, shape, jnp.float32, -k, k)

        wih_f = _pad_row_blocks(_pad_gate_cols(u(kk[0], (din, 3 * hidden)), hidden, HP),
                                hidden, HP, nblk)
        wih_b = _pad_row_blocks(_pad_gate_cols(u(kk[1], (din, 3 * hidden)), hidden, HP),
                                hidden, HP, nblk)
        whh_f = _pad_row_blocks(_pad_gate_cols(u(kk[2], (hidden, 3 * hidden)), hidden, HP),
                                hidden, HP, 1)
        whh_b = _pad_row_blocks(_pad_gate_cols(u(kk[3], (hidden, 3 * hidden)), hidden, HP),
                                hidden, HP, 1)
        bih_f = _pad_gate_cols(u(kk[4], (1, 3 * hidden)), hidden, HP)
        bih_b = _pad_gate_cols(u(kk[5], (1, 3 * hidden)), hidden, HP)
        bhh_f = _pad_gate_cols(u(kk[6], (1, 3 * hidden)), hidden, HP)
        bhh_b = _pad_gate_cols(u(kk[7], (1, 3 * hidden)), hidden, HP)
        gru.append({
            # fwd | bwd input projections fused along the output dim (one MXU dot)
            "w_ih": jnp.concatenate([wih_f, wih_b], axis=1).astype(jnp.bfloat16),
            "b_ih": jnp.concatenate([bih_f, bih_b], axis=1),
            "w_hh_f": whh_f.astype(jnp.bfloat16), "b_hh_f": bhh_f,
            "w_hh_b": whh_b.astype(jnp.bfloat16), "b_hh_b": bhh_b,
        })
    params["gru"] = gru

    kf = 1.0 / math.sqrt(2 * hidden)
    kfc = jax.random.split(keys[1 + num_layers], 2)
    fc_w = jax.random.uniform(kfc[0], (2 * hidden, output), jnp.float32, -kf, kf)
    fc_b = jax.random.uniform(kfc[1], (1, output), jnp.float32, -kf, kf)
    # rows [0:H) multiply the BACKWARD final hidden, rows [HP:HP+H) the FORWARD one
    # (matches torch.cat([hidden[-1], hidden[-2]], dim=1) order).
    fc_w_p = jnp.zeros((2 * HP, OP), jnp.float32)
    fc_w_p = fc_w_p.at[:hidden, :output].set(fc_w[:hidden])
    fc_w_p = fc_w_p.at[HP:HP + hidden, :output].set(fc_w[hidden:])
    params["fc_w"] = fc_w_p.astype(jnp.bfloat16)
    params["fc_b"] = jnp.zeros((1, OP), jnp.float32).at[:, :output].set(fc_b)
    return params


if __name__ == "__main__":
    # batch multiple of 16 (bf16 sublane packing); hidden/output padded to 128 lanes.
    B, T, V, H, L, O = 16, 8, 32, 32, 2, 8   # batch, seq, vocab, hidden, layers, classes
    key = jax.random.PRNGKey(0)
    kp, kt = jax.random.split(key)

    params = init_params(kp, V, H, O, L)
    tokens = jax.random.randint(kt, (B, T), 0, V, dtype=jnp.int32)        # (B, T) like torch input
    seq_length = jnp.clip(T - jnp.arange(B), 1, T).astype(jnp.int32)      # descending lengths

    out = rnn_classifier_forward(params, tokens, seq_length)
    jax.block_until_ready(out)
    assert out.shape == (B, O) and out.dtype == jnp.float32
    print("KERNEL_OK")
</pallas_src>

<mosaic_0001>
module attributes {stable_mosaic.version = 11 : i64} {
  func.func @_embed_onehot_kernel(%arg0: memref<128x1xi32, #tpu.memory_space<vmem>>, %arg1: memref<128x128xbf16, #tpu.memory_space<vmem>>, %arg2: memref<128x128xbf16, #tpu.memory_space<vmem>>) attributes {dimension_semantics = [], scalar_prefetch = 0 : i64, scratch_operands = 0 : i64, tpu.core_type = #tpu.core_type<tc>} {
    %0 = tpu.iota {dimensions = array<i32: 1>} : vector<128x128xi32>
    %c0 = arith.constant 0 : index
    %c0_0 = arith.constant 0 : index
    %1 = vector.load %arg0[%c0, %c0_0] : memref<128x1xi32, #tpu.memory_space<vmem>>, vector<128x1xi32>
    %2 = vector.broadcast %1 : vector<128x1xi32> to vector<128x128xi32>
    %3 = arith.cmpi eq, %0, %2 : vector<128x128xi32>
    %4 = arith.extui %3 : vector<128x128xi1> to vector<128x128xi32>
    %5 = arith.sitofp %4 : vector<128x128xi32> to vector<128x128xf32>
    %6 = arith.truncf %5 : vector<128x128xf32> to vector<128x128xbf16>
    %c0_1 = arith.constant 0 : index
    %c0_2 = arith.constant 0 : index
    %7 = vector.load %arg1[%c0_1, %c0_2] : memref<128x128xbf16, #tpu.memory_space<vmem>>, vector<128x128xbf16>
    %cst = arith.constant dense<0.000000e+00> : vector<128x128xf32>
    %8 = tpu.matmul %6, %7, %cst {dimension_numbers = #tpu.dot_dimension_numbers<[1], [0], [0], [1], [0, 0, 1, 1], [], []>} : vector<128x128xbf16>, vector<128x128xbf16>, vector<128x128xf32> -> vector<128x128xf32>
    %9 = arith.truncf %8 : vector<128x128xf32> to vector<128x128xbf16>
    %c0_3 = arith.constant 0 : index
    %c0_4 = arith.constant 0 : index
    %10 = vector.load %arg2[%c0_3, %c0_4] : memref<128x128xbf16, #tpu.memory_space<vmem>>, vector<128x128xbf16>
    tpu.vector_store %arg2[%c0_3, %c0_4], %9 {strides = array<i32>} : memref<128x128xbf16, #tpu.memory_space<vmem>>, vector<128x128xbf16>,
    return
  }
}

</mosaic_0001>

<llo_original>
// kernel: tpu_custom_call.1
$region0: #{tpu_custom_call.1}
  #allocation0 [shape = 'u32[]', space=smem, size = 0x4, offset = 0x4, fixed_abs, tag = 'smem constant byte address 0x4 - core index']
  #allocation1 [shape = 'u32[144,128]{1,0:T(1,128)}', space=vmem, size = 0x12000, scoped, tag = 'internal scratch']
  %s0 = inlined_call_operand.vmem [shape: s32[128,1], index: 0, kind: input, shape index: {}]
  %s1 = inlined_call_operand.vmem [shape: bf16[128,128], index: 1, kind: input, shape index: {}]
  %s2 = inlined_call_operand.hbm [shape: bf16[128,128], index: 2, kind: output, shape index: {}]
  %s3 = sld [smem:[#allocation0]]
  $region18: #{tpu_custom_call.1} parent=0
    _
  %s5 = ssub.s32 1, %s3
  %s6 = scalar_select 0, %s5, %s3
  $region1: #{tpu_custom_call.1} parent=0
    #allocation2 [shape = 'u8[32768]{0}', space=vmem, size = 0x8000, scoped, tag = 'output window, operand 0, single buffered']
    #allocation3 [shape = 's32[1]{0}', space=sflag, size = 0x4, scoped, tag = 'scoped memory for tpu_custom_call.1']
    %7 = vsyncpa [#allocation3], 0
    // Predicated region
    $region2: #{tpu_custom_call.1} parent=1 // pred_check
      _
    $region3: #{tpu_custom_call.1} parent=1 // pred_check_branch
      %9 = sbr.rel (0) target = $region5
    $region4: #{tpu_custom_call.1} parent=1 // pred_region
      _
    $region5: #{tpu_custom_call.1} parent=1 // pred_fallthru
      _
    // Predicated region
    $region6: #{tpu_custom_call.1} parent=1 // pred_check
      _
    $region7: #{tpu_custom_call.1} parent=1 // pred_check_branch
      %11 = sbr.rel (0) target = $region9
    $region8: #{tpu_custom_call.1} parent=1 // pred_region
      _
    $region9: #{tpu_custom_call.1} parent=1 // pred_fallthru
      _
    %v13 = vlaneseq
    %v14 = vand.u32 %v13, 127
    %v15 = vld [vmem:[%s0] sm:$0xff]
    %v16 = vld [vmem:[%s0 + $0x8] sm:$0xff]
    %v17 = vld [vmem:[%s0 + $0x10] sm:$0xff]
    %v18 = vld [vmem:[%s0 + $0x18] sm:$0xff]
    %v19 = vld [vmem:[%s0 + $0x20] sm:$0xff]
    %v20 = vld [vmem:[%s0 + $0x28] sm:$0xff]
    %v21 = vld [vmem:[%s0 + $0x30] sm:$0xff]
    %v22 = vld [vmem:[%s0 + $0x38] sm:$0xff]
    %v23 = vld [vmem:[%s0 + $0x40] sm:$0xff]
    %v24 = vld [vmem:[%s0 + $0x48] sm:$0xff]
    %v25 = vld [vmem:[%s0 + $0x50] sm:$0xff]
    %v26 = vld [vmem:[%s0 + $0x58] sm:$0xff]
    %v27 = vld [vmem:[%s0 + $0x60] sm:$0xff]
    %v28 = vld [vmem:[%s0 + $0x68] sm:$0xff]
    %v29 = vld [vmem:[%s0 + $0x70] sm:$0xff]
    %v30 = vld [vmem:[%s0 + $0x78] sm:$0xff]
    %31 = vset.pattern.permute.xlu0 0
    %32 = vperm.xlu0 %31, %v15
    %v33 = vpop.permute.xlu0 %32
    %34 = vset.pattern.permute.xlu0 0
    %35 = vperm.xlu0 %34, %v16
    %v36 = vpop.permute.xlu0 %35
    %37 = vset.pattern.permute.xlu0 0
    %38 = vperm.xlu0 %37, %v17
    %v39 = vpop.permute.xlu0 %38
    %40 = vset.pattern.permute.xlu0 0
    %41 = vperm.xlu0 %40, %v18
    %v42 = vpop.permute.xlu0 %41
    %43 = vset.pattern.permute.xlu0 0
    %44 = vperm.xlu0 %43, %v19
    %v45 = vpop.permute.xlu0 %44
    %46 = vset.pattern.permute.xlu0 0
    %47 = vperm.xlu0 %46, %v20
    %v48 = vpop.permute.xlu0 %47
    %49 = vset.pattern.permute.xlu0 0
    %50 = vperm.xlu0 %49, %v21
    %v51 = vpop.permute.xlu0 %50
    %52 = vset.pattern.permute.xlu0 0
    %53 = vperm.xlu0 %52, %v22
    %v54 = vpop.permute.xlu0 %53
    %55 = vset.pattern.permute.xlu0 0
    %56 = vperm.xlu0 %55, %v23
    %v57 = vpop.permute.xlu0 %56
    %58 = vset.pattern.permute.xlu0 0
    %59 = vperm.xlu0 %58, %v24
    %v60 = vpop.permute.xlu0 %59
    %61 = vset.pattern.permute.xlu0 0
    %62 = vperm.xlu0 %61, %v25
    %v63 = vpop.permute.xlu0 %62
    %64 = vset.pattern.permute.xlu0 0
    %65 = vperm.xlu0 %64, %v26
    %v66 = vpop.permute.xlu0 %65
    %67 = vset.pattern.permute.xlu0 0
    %68 = vperm.xlu0 %67, %v27
    %v69 = vpop.permute.xlu0 %68
    %70 = vset.pattern.permute.xlu0 0
    %71 = vperm.xlu0 %70, %v28
    %v72 = vpop.permute.xlu0 %71
    %73 = vset.pattern.permute.xlu0 0
    %74 = vperm.xlu0 %73, %v29
    %v75 = vpop.permute.xlu0 %74
    %76 = vset.pattern.permute.xlu0 0
    %77 = vperm.xlu0 %76, %v30
    %v78 = vpop.permute.xlu0 %77
    %vm79 = vcmp.eq.s32.totalorder %v14, %v33
    %vm80 = vcmp.eq.s32.totalorder %v14, %v36
    %vm81 = vcmp.eq.s32.totalorder %v14, %v39
    %vm82 = vcmp.eq.s32.totalorder %v14, %v42
    %vm83 = vcmp.eq.s32.totalorder %v14, %v45
    %vm84 = vcmp.eq.s32.totalorder %v14, %v48
    %vm85 = vcmp.eq.s32.totalorder %v14, %v51
    %vm86 = vcmp.eq.s32.totalorder %v14, %v54
    %vm87 = vcmp.eq.s32.totalorder %v14, %v57
    %vm88 = vcmp.eq.s32.totalorder %v14, %v60
    %vm89 = vcmp.eq.s32.totalorder %v14, %v63
    %vm90 = vcmp.eq.s32.totalorder %v14, %v66
    %vm91 = vcmp.eq.s32.totalorder %v14, %v69
    %vm92 = vcmp.eq.s32.totalorder %v14, %v72
    %vm93 = vcmp.eq.s32.totalorder %v14, %v75
    %vm94 = vcmp.eq.s32.totalorder %v14, %v78
    %v95 = vsel %vm79, 1, 0
    %v96 = vsel %vm80, 1, 0
    %v97 = vsel %vm81, 1, 0
    %v98 = vsel %vm82, 1, 0
    %v99 = vsel %vm83, 1, 0
    %v100 = vsel %vm84, 1, 0
    %v101 = vsel %vm85, 1, 0
    %v102 = vsel %vm86, 1, 0
    %v103 = vsel %vm87, 1, 0
    %v104 = vsel %vm88, 1, 0
    %v105 = vsel %vm89, 1, 0
    %v106 = vsel %vm90, 1, 0
    %v107 = vsel %vm91, 1, 0
    %v108 = vsel %vm92, 1, 0
    %v109 = vsel %vm93, 1, 0
    %v110 = vsel %vm94, 1, 0
    %v111 = vcvt.s32.f32 %v95
    %v112 = vcvt.s32.f32 %v96
    %v113 = vcvt.s32.f32 %v97
    %v114 = vcvt.s32.f32 %v98
    %v115 = vcvt.s32.f32 %v99
    %v116 = vcvt.s32.f32 %v100
    %v117 = vcvt.s32.f32 %v101
    %v118 = vcvt.s32.f32 %v102
    %v119 = vcvt.s32.f32 %v103
    %v120 = vcvt.s32.f32 %v104
    %v121 = vcvt.s32.f32 %v105
    %v122 = vcvt.s32.f32 %v106
    %v123 = vcvt.s32.f32 %v107
    %v124 = vcvt.s32.f32 %v108
    %v125 = vcvt.s32.f32 %v109
    %v126 = vcvt.s32.f32 %v110
    %v127 = vpack.c.bf16 %v112, %v111
    %v128 = vpack.c.bf16 %v114, %v113
    %v129 = vpack.c.bf16 %v116, %v115
    %v130 = vpack.c.bf16 %v118, %v117
    %v131 = vpack.c.bf16 %v120, %v119
    %v132 = vpack.c.bf16 %v122, %v121
    %v133 = vpack.c.bf16 %v124, %v123
    %v134 = vpack.c.bf16 %v126, %v125
    %v135 = vld [vmem:[%s1] sm:$0xf]
    %v136 = vld [vmem:[%s1 + $0x4] sm:$0xf]
    %v137 = vld [vmem:[%s1 + $0x8] sm:$0xf]
    %v138 = vld [vmem:[%s1 + $0xc] sm:$0xf]
    %v139 = vld [vmem:[%s1 + $0x10] sm:$0xf]
    %v140 = vld [vmem:[%s1 + $0x14] sm:$0xf]
    %v141 = vld [vmem:[%s1 + $0x18] sm:$0xf]
    %v142 = vld [vmem:[%s1 + $0x1c] sm:$0xf]
    %v143 = vld [vmem:[%s1 + $0x20] sm:$0xf]
    %v144 = vld [vmem:[%s1 + $0x24] sm:$0xf]
    %v145 = vld [vmem:[%s1 + $0x28] sm:$0xf]
    %v146 = vld [vmem:[%s1 + $0x2c] sm:$0xf]
    %v147 = vld [vmem:[%s1 + $0x30] sm:$0xf]
    %v148 = vld [vmem:[%s1 + $0x34] sm:$0xf]
    %v149 = vld [vmem:[%s1 + $0x38] sm:$0xf]
    %v150 = vld [vmem:[%s1 + $0x3c] sm:$0xf]
    %v167 = vunpack.c.l.b16 %v135
    %v168 = vunpack.c.l.b16 %v136
    %v169 = vunpack.c.l.b16 %v137
    %v170 = vunpack.c.l.b16 %v138
    %v171 = vunpack.c.l.b16 %v139
    %v172 = vunpack.c.l.b16 %v140
    %v173 = vunpack.c.l.b16 %v141
    %v174 = vunpack.c.l.b16 %v142
    %v175 = vunpack.c.l.b16 %v143
    %v176 = vunpack.c.l.b16 %v144
    %v177 = vunpack.c.l.b16 %v145
    %v178 = vunpack.c.l.b16 %v146
    %v179 = vunpack.c.l.b16 %v147
    %v180 = vunpack.c.l.b16 %v148
    %v181 = vunpack.c.l.b16 %v149
    %v182 = vunpack.c.l.b16 %v150
    %v183 = vpack.c.b16 %v168, %v167
    %v184 = vpack.c.b16 %v170, %v169
    %v185 = vpack.c.b16 %v172, %v171
    %v186 = vpack.c.b16 %v174, %v173
    %v187 = vpack.c.b16 %v176, %v175
    %v188 = vpack.c.b16 %v178, %v177
    %v189 = vpack.c.b16 %v180, %v179
    %v190 = vpack.c.b16 %v182, %v181
    %199 = vmatprep.subr.bf16.mxu0 0
    %200 = vmatpush1.bf16.msra.mxu0 %v183
    %201 = vmatprep.subr.bf16.mxu0 0
    %202 = vmatpush1.bf16.msra.mxu0 %v184
    %203 = vmatprep.subr.bf16.mxu0 0
    %204 = vmatpush1.bf16.msra.mxu0 %v185
    %205 = vmatprep.subr.bf16.mxu0 0
    %206 = vmatpush1.bf16.msra.mxu0 %v186
    %207 = vmatprep.subr.bf16.mxu0 0
    %208 = vmatpush1.bf16.msra.mxu0 %v187
    %209 = vmatprep.subr.bf16.mxu0 0
    %210 = vmatpush1.bf16.msra.mxu0 %v188
    %211 = vmatprep.subr.bf16.mxu0 0
    %212 = vmatpush1.bf16.msra.mxu0 %v189
    %213 = vmatprep.subr.bf16.mxu0 0
    %214 = vmatpush1.bf16.msra.mxu0 %v190
    %215 = vmatprep.subr.bf16.mxu0 0
    %216 = vmatpush1.bf16.msra.mxu0 0
    %217 = vmatprep.subr.bf16.mxu0 0
    %218 = vmatpush1.bf16.msra.mxu0 0
    %219 = vmatprep.subr.bf16.mxu0 0
    %220 = vmatpush1.bf16.msra.mxu0 0
    %221 = vmatprep.subr.bf16.mxu0 0
    %222 = vmatpush1.bf16.msra.mxu0 0
    %223 = vmatprep.subr.bf16.mxu0 0
    %224 = vmatpush1.bf16.msra.mxu0 0
    %225 = vmatprep.subr.bf16.mxu0 0
    %226 = vmatpush1.bf16.msra.mxu0 0
    %227 = vmatprep.subr.bf16.mxu0 0
    %228 = vmatpush1.bf16.msra.mxu0 0
    %229 = vmatprep.subr.bf16.mxu0 0
    %230 = vmatpush1.bf16.msra.mxu0 0
    %231 = vmatprep.mubr.bf16.mxu0 0
    %232 = vmatmul.mubr.bf16.gmra.mrb[0].mxu0 %v127
    %v233 = vpop.f32.mrb[0].mxu0
    %v234 = vadd.f32 0.0, %v233
    %v235 = vpop.f32.mrb[0].mxu0
    %v236 = vpop.f32.mrb[0].mxu0
    %v237 = vadd.f32 0.0, %v236
    %v238 = vpop.f32.mrb[0].mxu0
    %239 = vmatprep.mubr.bf16.mxu0 0
    %240 = vmatmul.mubr.bf16.gmra.mrb[0].mxu0 %v128
    %v241 = vpop.f32.mrb[0].mxu0
    %v242 = vadd.f32 0.0, %v241
    %v243 = vpop.f32.mrb[0].mxu0
    %v244 = vpop.f32.mrb[0].mxu0
    %v245 = vadd.f32 0.0, %v244
    %v246 = vpop.f32.mrb[0].mxu0
    %247 = vmatprep.mubr.bf16.mxu0 0
    %248 = vmatmul.mubr.bf16.gmra.mrb[0].mxu0 %v129
    %v249 = vpop.f32.mrb[0].mxu0
    %v250 = vadd.f32 0.0, %v249
    %v251 = vpop.f32.mrb[0].mxu0
    %v252 = vpop.f32.mrb[0].mxu0
    %v253 = vadd.f32 0.0, %v252
    %v254 = vpop.f32.mrb[0].mxu0
    %255 = vmatprep.mubr.bf16.mxu0 0
    %256 = vmatmul.mubr.bf16.gmra.mrb[0].mxu0 %v130
    %v257 = vpop.f32.mrb[0].mxu0
    %v258 = vadd.f32 0.0, %v257
    %v259 = vpop.f32.mrb[0].mxu0
    %v260 = vpop.f32.mrb[0].mxu0
    %v261 = vadd.f32 0.0, %v260
    %v262 = vpop.f32.mrb[0].mxu0
    %263 = vmatprep.mubr.bf16.mxu0 0
    %264 = vmatmul.mubr.bf16.gmra.mrb[0].mxu0 %v131
    %v265 = vpop.f32.mrb[0].mxu0
    %v266 = vadd.f32 0.0, %v265
    %v267 = vpop.f32.mrb[0].mxu0
    %v268 = vpop.f32.mrb[0].mxu0
    %v269 = vadd.f32 0.0, %v268
    %v270 = vpop.f32.mrb[0].mxu0
    %271 = vmatprep.mubr.bf16.mxu0 0
    %272 = vmatmul.mubr.bf16.gmra.mrb[0].mxu0 %v132
    %v273 = vpop.f32.mrb[0].mxu0
    %v274 = vadd.f32 0.0, %v273
    %v275 = vpop.f32.mrb[0].mxu0
    %v276 = vpop.f32.mrb[0].mxu0
    %v277 = vadd.f32 0.0, %v276
    %v278 = vpop.f32.mrb[0].mxu0
    %279 = vmatprep.mubr.bf16.mxu0 0
    %280 = vmatmul.mubr.bf16.gmra.mrb[0].mxu0 %v133
    %v281 = vpop.f32.mrb[0].mxu0
    %v282 = vadd.f32 0.0, %v281
    %v283 = vpop.f32.mrb[0].mxu0
    %v284 = vpop.f32.mrb[0].mxu0
    %v285 = vadd.f32 0.0, %v284
    %v286 = vpop.f32.mrb[0].mxu0
    %287 = vmatprep.mubr.bf16.mxu0 0
    %288 = vmatmul.mubr.bf16.gmra.mrb[0].mxu0 %v134
    %v289 = vpop.f32.mrb[0].mxu0
    %v290 = vadd.f32 0.0, %v289
    %v291 = vpop.f32.mrb[0].mxu0
    %v292 = vpop.f32.mrb[0].mxu0
    %v293 = vadd.f32 0.0, %v292
    %v294 = vpop.f32.mrb[0].mxu0
    %295 = vdwg.mxu0
    %v296 = vpack.c.bf16 %v237, %v234
    %v297 = vpack.c.bf16 %v245, %v242
    %v298 = vpack.c.bf16 %v253, %v250
    %v299 = vpack.c.bf16 %v261, %v258
    %v300 = vpack.c.bf16 %v269, %v266
    %v301 = vpack.c.bf16 %v277, %v274
    %v302 = vpack.c.bf16 %v285, %v282
    %v303 = vpack.c.bf16 %v293, %v290
    %v312 = vunpack.c.l.b16 %v296
    %v313 = vunpack.c.h.b16 %v296
    %v314 = vunpack.c.l.b16 %v297
    %v315 = vunpack.c.h.b16 %v297
    %v316 = vunpack.c.l.b16 %v298
    %v317 = vunpack.c.h.b16 %v298
    %v318 = vunpack.c.l.b16 %v299
    %v319 = vunpack.c.h.b16 %v299
    %v320 = vunpack.c.l.b16 %v300
    %v321 = vunpack.c.h.b16 %v300
    %v322 = vunpack.c.l.b16 %v301
    %v323 = vunpack.c.h.b16 %v301
    %v324 = vunpack.c.l.b16 %v302
    %v325 = vunpack.c.h.b16 %v302
    %v326 = vunpack.c.l.b16 %v303
    %v327 = vunpack.c.h.b16 %v303
    %v328 = vpack.c.b16 %v312, %v312
    %v329 = vpack.c.b16 %v313, %v313
    %v330 = vpack.c.b16 %v314, %v314
    %v331 = vpack.c.b16 %v315, %v315
    %v332 = vpack.c.b16 %v316, %v316
    %v333 = vpack.c.b16 %v317, %v317
    %v334 = vpack.c.b16 %v318, %v318
    %v335 = vpack.c.b16 %v319, %v319
    %v336 = vpack.c.b16 %v320, %v320
    %v337 = vpack.c.b16 %v321, %v321
    %v338 = vpack.c.b16 %v322, %v322
    %v339 = vpack.c.b16 %v323, %v323
    %v340 = vpack.c.b16 %v324, %v324
    %v341 = vpack.c.b16 %v325, %v325
    %v342 = vpack.c.b16 %v326, %v326
    %v343 = vpack.c.b16 %v327, %v327
    %360 = vst [vmem:[#allocation2] sm:$0xf] %v328
    %361 = vst [vmem:[#allocation2 + $0x4] sm:$0xf] %v329
    %362 = vst [vmem:[#allocation2 + $0x8] sm:$0xf] %v330
    %363 = vst [vmem:[#allocation2 + $0xc] sm:$0xf] %v331
    %364 = vst [vmem:[#allocation2 + $0x10] sm:$0xf] %v332
    %365 = vst [vmem:[#allocation2 + $0x14] sm:$0xf] %v333
    %366 = vst [vmem:[#allocation2 + $0x18] sm:$0xf] %v334
    %367 = vst [vmem:[#allocation2 + $0x1c] sm:$0xf] %v335
    %368 = vst [vmem:[#allocation2 + $0x20] sm:$0xf] %v336
    %369 = vst [vmem:[#allocation2 + $0x24] sm:$0xf] %v337
    %370 = vst [vmem:[#allocation2 + $0x28] sm:$0xf] %v338
    %371 = vst [vmem:[#allocation2 + $0x2c] sm:$0xf] %v339
    %372 = vst [vmem:[#allocation2 + $0x30] sm:$0xf] %v340
    %373 = vst [vmem:[#allocation2 + $0x34] sm:$0xf] %v341
    %374 = vst [vmem:[#allocation2 + $0x38] sm:$0xf] %v342
    %375 = vst [vmem:[#allocation2 + $0x3c] sm:$0xf] %v343
    // Predicated region
    $region10: #{tpu_custom_call.1} parent=1 // pred_check
      _
    $region11: #{tpu_custom_call.1} parent=1 // pred_check_branch
      %377 = sbr.rel (0) target = $region13
    $region12: #{tpu_custom_call.1} parent=1 // pred_region
      %s379 = ssub.s32 1024, 1024
      %380 = vsyncadd [#allocation3], %s379
      %s381 = sshll.u32 [#allocation2], 4
      %s382 = int_to_ptr.vmem [resolvable:$true] %s381
      %387 = dma.vmem_to_hbm [thread:$0]  %s382, 1024, %s2, [#allocation3], 64, 64, 4
    $region13: #{tpu_custom_call.1} parent=1 // pred_fallthru
      _
    // Predicated region
    $region14: #{tpu_custom_call.1} parent=1 // pred_check
      _
    $region15: #{tpu_custom_call.1} parent=1 // pred_check_branch
      %389 = sbr.rel (0) target = $region17
    $region16: #{tpu_custom_call.1} parent=1 // pred_region
      %390 = dma.done [#allocation3], 1024
    $region17: #{tpu_custom_call.1} parent=1 // pred_fallthru
      _
    %391 = vsyncpa [#allocation3], 1

</llo_original>
